<compile_context>
chip_gen: v7x
topology: tpu7x:2x2x1
jax: 0.10.0
libtpu: 0.0.40
codegen_flags: <defaults>
</compile_context>

<pallas_src>
import functools

import jax
import jax.numpy as jnp
from jax.experimental import pallas as pl
from jax.experimental.pallas import tpu as pltpu

N_BITS = 8
N_LEVELS = 2 ** N_BITS


# ---------------------------------------------------------------------------
# Generation-aware sizing.
# ---------------------------------------------------------------------------
def _tpu_vmem_capacity_bytes():
    try:
        info = pltpu.get_tpu_info()
        cap = getattr(info, "vmem_capacity_bytes", None)
        if cap:
            return int(cap)
    except Exception:
        pass
    # Conservative fallback = smallest per-TC VMEM among targets (v7x).
    return 64 * 1024 * 1024


def _vmem_limit_bytes():
    # 3/4 of physical, capped at 64 MiB: 64 MiB on v5e/v6e, 48 MiB on v7x.
    return min(_tpu_vmem_capacity_bytes() * 3 // 4, 64 * 1024 * 1024)


def _block_target_bytes():
    # in+out double-buffered (~4x block) plus f32 quant-chain temporaries must
    # stay inside the scoped-VMEM limit: ~5.3 MiB on v5e/v6e, ~4 MiB on v7x.
    return min(8 * 1024 * 1024, _vmem_limit_bytes() // 12)


def _pick_row_tile(oc, ic, dtype):
    """Rows per grid step: large (multi-MiB) HBM-side blocks, dtype-aware
    sublane alignment, and >= 2 grid steps when possible (v7x megacore)."""
    itemsize = jnp.dtype(dtype).itemsize
    sublane = max(8, 32 // max(itemsize, 1))          # 8 f32 / 16 bf16 / 32 int8
    padded_oc = -(-oc // sublane) * sublane
    # TODO(synk): for pathologically wide rows (sublane * ic * itemsize beyond
    # the VMEM budget) a reduction-axis-tiled two-pass variant would be needed.
    rows = (_block_target_bytes() // max(ic * itemsize, 1)) // sublane * sublane
    rows = int(max(sublane, rows))
    rows = min(rows, padded_oc)
    if padded_oc >= 2 * sublane:
        half = -(-(padded_oc // 2) // sublane) * sublane
        rows = min(rows, max(sublane, half))          # grid length >= 2
    return rows, sublane


# ---------------------------------------------------------------------------
# Fused kernel: per-row calibration + fake-quant in a single HBM pass.
# Rows never mix, so a partial last row-block (oc % row_tile != 0) is safe:
# out-of-bounds rows compute garbage that Pallas discards on writeback.
# ---------------------------------------------------------------------------
def _calib_quant_kernel(x_ref, y_ref, scale_ref, zp_ref):
    x = x_ref[...]                                         # native dtype block
    # min/max are exact in the native dtype (bf16 reduce runs on packed vregs
    # on v6e/v7x); only the per-row results are promoted to f32.
    x_min = jnp.min(x, axis=-1, keepdims=True).astype(jnp.float32)   # (rows,1)
    x_max = jnp.max(x, axis=-1, keepdims=True).astype(jnp.float32)   # (rows,1)
    scale = (x_max - x_min) * (1.0 / N_LEVELS)             # exact pow2 factor
    zp = x_min
    # NOTE: matches the PyTorch module exactly, including scale == 0 -> inf/NaN
    # for a constant row (no epsilon guard, per spec).
    inv_scale = 1.0 / scale                                # one divide per row
    xf = x.astype(jnp.float32)
    x_int = jnp.clip(jnp.round(xf * inv_scale + zp), 0.0, float(N_LEVELS - 1))
    y_ref[...] = ((x_int - zp) * scale).astype(y_ref.dtype)
    scale_ref[...] = scale
    zp_ref[...] = zp


# ---------------------------------------------------------------------------
# Quant-only kernels (module forward with cached scale/zero_point).
# ---------------------------------------------------------------------------
def _quant_body(x_ref, y_ref, scale, zp):
    inv_scale = 1.0 / scale
    xf = x_ref[...].astype(jnp.float32)
    x_int = jnp.clip(jnp.round(xf * inv_scale + zp), 0.0, float(N_LEVELS - 1))
    y_ref[...] = ((x_int - zp) * scale).astype(y_ref.dtype)


def _quant_kernel_resident(x_ref, scale_ref, zp_ref, y_ref, *, row_tile):
    # scale/zp are whole-array VMEM-resident; slice the rows of this stripe.
    r0 = pl.multiple_of(pl.program_id(0) * row_tile, row_tile)
    scale = scale_ref[pl.ds(r0, row_tile), :].astype(jnp.float32)
    zp = zp_ref[pl.ds(r0, row_tile), :].astype(jnp.float32)
    _quant_body(x_ref, y_ref, scale, zp)


def _quant_kernel_tiled(x_ref, scale_ref, zp_ref, y_ref):
    _quant_body(x_ref, y_ref,
                scale_ref[...].astype(jnp.float32),
                zp_ref[...].astype(jnp.float32))


# ---------------------------------------------------------------------------
# Wrapper mirroring WeightPCQuantizer.forward.
# Returns (x_dequant, scale, zero_point); scale/zero_point are (oc, 1) f32 as
# the module stores them.
# ---------------------------------------------------------------------------
def weight_pc_quantizer_forward(x, scale=None, zero_point=None,
                                do_calibration=True):
    assert x.ndim == 2, "WeightPCQuantizer expects a [out_channel, in_channel] weight"
    oc, ic = x.shape
    itemsize = jnp.dtype(x.dtype).itemsize
    row_tile, _ = _pick_row_tile(oc, ic, x.dtype)
    grid_len = pl.cdiv(oc, row_tile)
    grid = (grid_len,)

    # TODO(synk): if ic is not a multiple of 128, callers should pad the lane
    # dim to avoid masked partial stores on the trailing vreg of every row.
    x_spec = pl.BlockSpec((row_tile, ic), lambda i: (i, 0))      # lane-dense stripe
    row_spec = pl.BlockSpec((row_tile, 1), lambda i: (i, 0))     # per-row scalars
    cparams = pltpu.CompilerParams(dimension_semantics=("parallel",),
                                   vmem_limit_bytes=_vmem_limit_bytes())

    if do_calibration:
        cost = pl.CostEstimate(flops=10 * oc * ic, transcendentals=0,
                               bytes_accessed=2 * oc * ic * itemsize + 8 * oc)
        y, scale, zero_point = pl.pallas_call(
            _calib_quant_kernel,
            out_shape=(jax.ShapeDtypeStruct((oc, ic), x.dtype),
                       jax.ShapeDtypeStruct((oc, 1), jnp.float32),
                       jax.ShapeDtypeStruct((oc, 1), jnp.float32)),
            grid=grid,
            in_specs=[x_spec],
            out_specs=(x_spec, row_spec, row_spec),
            compiler_params=cparams,
            cost_estimate=cost,
        )(x)
        return y, scale, zero_point

    scale = jnp.asarray(scale, jnp.float32).reshape(oc, 1)
    zero_point = jnp.asarray(zero_point, jnp.float32).reshape(oc, 1)
    cost = pl.CostEstimate(flops=8 * oc * ic, transcendentals=0,
                           bytes_accessed=2 * oc * ic * itemsize + 8 * oc)

    padded_rows = grid_len * row_tile
    # Lane-padded VMEM footprint of keeping both (padded_rows,1) arrays resident.
    resident_bytes = 2 * padded_rows * 128 * 4
    if resident_bytes <= 2 * 1024 * 1024:
        pad = padded_rows - oc
        scale_p = jnp.pad(scale, ((0, pad), (0, 0)))
        zp_p = jnp.pad(zero_point, ((0, pad), (0, 0)))
        y = pl.pallas_call(
            functools.partial(_quant_kernel_resident, row_tile=row_tile),
            out_shape=jax.ShapeDtypeStruct((oc, ic), x.dtype),
            grid=grid,
            in_specs=[x_spec,
                      pl.BlockSpec(memory_space=pltpu.MemorySpace.VMEM),
                      pl.BlockSpec(memory_space=pltpu.MemorySpace.VMEM)],
            out_specs=x_spec,
            compiler_params=cparams,
            cost_estimate=cost,
        )(x, scale_p, zp_p)
    else:
        y = pl.pallas_call(
            _quant_kernel_tiled,
            out_shape=jax.ShapeDtypeStruct((oc, ic), x.dtype),
            grid=grid,
            in_specs=[x_spec, row_spec, row_spec],
            out_specs=x_spec,
            compiler_params=cparams,
            cost_estimate=cost,
        )(x, scale, zero_point)
    return y, scale, zero_point


# ---------------------------------------------------------------------------
# Pure-JAX reference (literal translation of the PyTorch module).
# ---------------------------------------------------------------------------
def _reference(x):
    xf = x.astype(jnp.float32)
    x_min = jnp.min(xf, axis=1, keepdims=True)
    x_max = jnp.max(xf, axis=1, keepdims=True)
    scale = (x_max - x_min) / N_LEVELS
    zp = x_min
    x_int = jnp.clip(jnp.round(xf / scale + zp), 0.0, N_LEVELS - 1)
    return ((x_int - zp) * scale).astype(x.dtype), scale, zp


if __name__ == "__main__":
    key = jax.random.PRNGKey(0)
    k1, k2, k3 = jax.random.split(key, 3)

    # --- Case 1: f32 weight, calibration + cached-scale forward -------------
    x = jax.random.normal(k1, (64, 256), dtype=jnp.float32)
    y, scale, zp = weight_pc_quantizer_forward(x, do_calibration=True)
    y = jax.block_until_ready(y)
    y_ref, scale_ref, zp_ref = _reference(x)
    assert y.shape == x.shape and y.dtype == x.dtype
    assert jnp.allclose(scale, scale_ref, atol=1e-7, rtol=1e-6)
    assert jnp.allclose(zp, zp_ref, atol=1e-7, rtol=1e-6)
    # Kernel hoists 1/scale (x * inv_scale vs reference x / scale): results are
    # identical except possibly rare exact round-half boundary flips, each at
    # most one quantization step.
    err = jnp.abs(y - y_ref)
    assert float(jnp.mean((err <= 1e-5).astype(jnp.float32))) >= 0.999
    assert float(jnp.max(err)) <= float(jnp.max(scale_ref)) + 1e-5

    y2, _, _ = weight_pc_quantizer_forward(x, scale=scale, zero_point=zp,
                                           do_calibration=False)
    y2 = jax.block_until_ready(y2)
    assert jnp.allclose(y, y2, atol=1e-6, rtol=0.0)

    # --- Case 2: partial last row-block (oc not a row-tile multiple) --------
    x3 = jax.random.normal(k2, (50, 384), dtype=jnp.float32)
    y3, s3, z3 = weight_pc_quantizer_forward(x3, do_calibration=True)
    y3 = jax.block_until_ready(y3)
    y3_ref, s3_ref, z3_ref = _reference(x3)
    assert jnp.allclose(s3, s3_ref, atol=1e-7, rtol=1e-6)
    assert jnp.allclose(z3, z3_ref, atol=1e-7, rtol=1e-6)
    err3 = jnp.abs(y3 - y3_ref)
    assert float(jnp.mean((err3 <= 1e-5).astype(jnp.float32))) >= 0.999
    assert float(jnp.max(err3)) <= float(jnp.max(s3_ref)) + 1e-5

    # --- Case 3: bf16 weight (16-row alignment, bf16 min/max reduction) -----
    xb = jax.random.normal(k3, (96, 512), dtype=jnp.bfloat16)
    yb, sb, zb = weight_pc_quantizer_forward(xb, do_calibration=True)
    yb = jax.block_until_ready(yb)
    yb_ref, sb_ref, zb_ref = _reference(xb)
    assert yb.dtype == jnp.bfloat16 and yb.shape == xb.shape
    assert jnp.allclose(sb, sb_ref, atol=1e-6, rtol=1e-5)
    assert jnp.allclose(zb, zb_ref, atol=1e-6, rtol=1e-5)
    errb = jnp.abs(yb.astype(jnp.float32) - yb_ref.astype(jnp.float32))
    assert float(jnp.max(errb)) <= 2.0 * float(jnp.max(sb_ref)) + 0.1

    print("KERNEL_OK")
</pallas_src>

<mosaic_0001>
module attributes {stable_mosaic.version = 11 : i64} {
  func.func @_calib_quant_kernel(%arg0: i32, %arg1: memref<32x256xf32, #tpu.memory_space<vmem>>, %arg2: memref<32x256xf32, #tpu.memory_space<vmem>>, %arg3: memref<32x1xf32, #tpu.memory_space<vmem>>, %arg4: memref<32x1xf32, #tpu.memory_space<vmem>>) attributes {dimension_semantics = [#tpu.dimension_semantics<parallel>], iteration_bounds = array<i64: 2>, scalar_prefetch = 0 : i64, scratch_operands = 0 : i64, tpu.core_type = #tpu.core_type<tc>, window_params = [{transform_indices = @transform_0, window_bounds = array<i64: 32, 256>}, {transform_indices = @transform_1, window_bounds = array<i64: 32, 256>}, {transform_indices = @transform_2, window_bounds = array<i64: 32, 1>}, {transform_indices = @transform_3, window_bounds = array<i64: 32, 1>}]} {
    %c0 = arith.constant 0 : index
    %c0_0 = arith.constant 0 : index
    %0 = vector.load %arg1[%c0, %c0_0] : memref<32x256xf32, #tpu.memory_space<vmem>>, vector<32x256xf32>
    %cst = arith.constant dense<0x7F800000> : vector<32xf32>
    %1 = vector.multi_reduction <minimumf>, %0, %cst [1] : vector<32x256xf32> to vector<32xf32>
    %2 = vector.shape_cast %1 : vector<32xf32> to vector<32x1xf32>
    %cst_1 = arith.constant dense<0xFF800000> : vector<32xf32>
    %3 = vector.multi_reduction <maximumf>, %0, %cst_1 [1] : vector<32x256xf32> to vector<32xf32>
    %4 = vector.shape_cast %3 : vector<32xf32> to vector<32x1xf32>
    %5 = arith.subf %4, %2 : vector<32x1xf32>
    %cst_2 = arith.constant 3.906250e-03 : f32
    %6 = vector.broadcast %cst_2 : f32 to vector<32x1xf32>
    %7 = arith.mulf %5, %6 : vector<32x1xf32>
    %cst_3 = arith.constant 1.000000e+00 : f32
    %8 = vector.broadcast %cst_3 : f32 to vector<32x1xf32>
    %9 = arith.divf %8, %7 : vector<32x1xf32>
    %10 = vector.broadcast %9 : vector<32x1xf32> to vector<32x256xf32>
    %11 = arith.mulf %0, %10 : vector<32x256xf32>
    %12 = vector.broadcast %2 : vector<32x1xf32> to vector<32x256xf32>
    %13 = arith.addf %11, %12 : vector<32x256xf32>
    %14 = math.roundeven %13 : vector<32x256xf32>
    %cst_4 = arith.constant 0.000000e+00 : f32
    %cst_5 = arith.constant 2.550000e+02 : f32
    %15 = vector.broadcast %cst_4 : f32 to vector<32x256xf32>
    %16 = arith.maximumf %15, %14 : vector<32x256xf32>
    %17 = vector.broadcast %cst_5 : f32 to vector<32x256xf32>
    %18 = arith.minimumf %17, %16 : vector<32x256xf32>
    %19 = vector.broadcast %2 : vector<32x1xf32> to vector<32x256xf32>
    %20 = arith.subf %18, %19 : vector<32x256xf32>
    %21 = vector.broadcast %7 : vector<32x1xf32> to vector<32x256xf32>
    %22 = arith.mulf %20, %21 : vector<32x256xf32>
    %c0_6 = arith.constant 0 : index
    %c0_7 = arith.constant 0 : index
    %23 = vector.load %arg2[%c0_6, %c0_7] : memref<32x256xf32, #tpu.memory_space<vmem>>, vector<32x256xf32>
    tpu.vector_store %arg2[%c0_6, %c0_7], %22 {strides = array<i32>} : memref<32x256xf32, #tpu.memory_space<vmem>>, vector<32x256xf32>,
    %c0_8 = arith.constant 0 : index
    %c0_9 = arith.constant 0 : index
    %24 = vector.load %arg3[%c0_8, %c0_9] : memref<32x1xf32, #tpu.memory_space<vmem>>, vector<32x1xf32>
    tpu.vector_store %arg3[%c0_8, %c0_9], %7 {strides = array<i32>} : memref<32x1xf32, #tpu.memory_space<vmem>>, vector<32x1xf32>,
    %c0_10 = arith.constant 0 : index
    %c0_11 = arith.constant 0 : index
    %25 = vector.load %arg4[%c0_10, %c0_11] : memref<32x1xf32, #tpu.memory_space<vmem>>, vector<32x1xf32>
    tpu.vector_store %arg4[%c0_10, %c0_11], %2 {strides = array<i32>} : memref<32x1xf32, #tpu.memory_space<vmem>>, vector<32x1xf32>,
    return
  }
  func.func @transform_0(%arg0: i32) -> (i32, i32) {
    %c0_i32 = arith.constant 0 : i32
    %c0_i32_0 = arith.constant 0 : i32
    return %arg0, %c0_i32 : i32, i32
  }
  func.func @transform_1(%arg0: i32) -> (i32, i32) {
    %c0_i32 = arith.constant 0 : i32
    %c0_i32_0 = arith.constant 0 : i32
    return %arg0, %c0_i32 : i32, i32
  }
  func.func @transform_2(%arg0: i32) -> (i32, i32) {
    %c0_i32 = arith.constant 0 : i32
    %c0_i32_0 = arith.constant 0 : i32
    return %arg0, %c0_i32 : i32, i32
  }
  func.func @transform_3(%arg0: i32) -> (i32, i32) {
    %c0_i32 = arith.constant 0 : i32
    %c0_i32_0 = arith.constant 0 : i32
    return %arg0, %c0_i32 : i32, i32
  }
}

</mosaic_0001>

<llo_original>
// kernel: tpu_custom_call.1
$region0: #{tpu_custom_call.1}
  #allocation0 [shape = 'u32[]', space=smem, size = 0x4, offset = 0x4, fixed_abs, tag = 'smem constant byte address 0x4 - core index']
  #allocation1 [shape = 'u32[144,128]{1,0:T(1,128)}', space=vmem, size = 0x12000, scoped, tag = 'internal scratch']
  %s0 = inlined_call_operand.hbm [shape: f32[64,256], index: 0, kind: input, shape index: {}]
  %s1 = inlined_call_operand.hbm [shape: f32[64,256], index: 1, kind: output, shape index: {0}]
  %s2 = inlined_call_operand.vmem [shape: f32[64,1], index: 2, kind: output, shape index: {1}]
  %s3 = inlined_call_operand.vmem [shape: f32[64,1], index: 3, kind: output, shape index: {2}]
  %4 = xla_tuple %s1, %s2, %s3
  %s5 = sld [smem:[#allocation0]]
  $region57: #{tpu_custom_call.1} parent=0
    _
  %s7 = ssub.s32 1, %s5
  %s8 = scalar_select 0, %s7, %s5
  $region1: #{tpu_custom_call.1} parent=0
    #allocation2 [shape = 'u8[65536]{0}', space=vmem, size = 0x10000, scoped, tag = 'input window, operand 0']
    #allocation3 [shape = 's32[2]{0}', space=sflag, size = 0x8, scoped, tag = 'scoped memory for tpu_custom_call.1']
    #allocation4 [shape = 's32[2]{0}', space=sflag, size = 0x8, scoped, tag = 'scoped memory for tpu_custom_call.1']
    #allocation5 [shape = 'u8[65536]{0}', space=vmem, size = 0x10000, scoped, tag = 'output window, operand 0']
    %9 = vsyncpa [#allocation3], 0
    %s10 = scalar_lea.sflag [#allocation3], 1
    %11 = vsyncpa %s10, 0
    %12 = vsyncpa [#allocation4], 0
    %s13 = scalar_lea.sflag [#allocation4], 1
    %14 = vsyncpa %s13, 0
    loop: start=0, step=1, limit=4
    $region2: #{tpu_custom_call.1} parent=1 // loop_pre_header
      _
    $region3: #{tpu_custom_call.1} parent=1 // loop_header
      %s16 = sphi 0, %s20
      %p17 = scmp.ge.s32.totalorder %s16, 4
      %s26 = sphi 0, %s28
      %s29 = sphi 0, %s26
      %s30 = sphi 0, %s29
      %s46 = sphi 0, %s30
      %s52 = sphi 0, %s54
      %s55 = sphi 0, %s52
      %s56 = sphi 0, %s55
      %s72 = sphi 0, %s56
      %s78 = sphi 0, %s80
      %s81 = sphi 0, %s78
      %s82 = sphi 0, %s81
      %s98 = sphi 0, %s82
      %s104 = sphi 0, %s106
      %s107 = sphi 0, %s104
      %s108 = sphi 0, %s107
      %s124 = sphi 0, %s108
    $region4: #{tpu_custom_call.1} parent=1 // loop_header_branch
      %19 = sbr.rel (%p17) target = $region8
    $region5: #{tpu_custom_call.1} parent=1 // loop_body
      %s21 = ssub.s32 %s16, 1
      %s22 = ssub.s32 %s16, 2
      %s23 = sadd.s32 %s16, 1
      %s24 = ssub.s32 %s16, %s23
      %p25 = scmp.eq.s32.totalorder %s24, 0
      %s27 = sadd.s32 %s26, 1
      %s28 = scalar_select %p25, %s26, %s27
      %p31 = pneg %p25
      %p32 = scmp.eq.s32.totalorder %s16, 1
      %p33 = por %p31, %p32
      %p34 = scmp.ne.s32.totalorder %s26, %s29
      %p35 = scmp.eq.s32.totalorder %s16, 0
      %p36 = por %p34, %p35
      %p37 = scmp.ne.s32.totalorder %s26, %s29
      %p38 = scmp.eq.s32.totalorder %s21, 1
      %p39 = por %p37, %p38
      %p40 = scmp.ne.s32.totalorder %s29, %s30
      %p41 = scmp.eq.s32.totalorder %s21, 0
      %p42 = por %p40, %p41
      %p43 = scmp.ne.s32.totalorder %s29, %s30
      %p44 = scmp.eq.s32.totalorder %s22, 1
      %p45 = por %p43, %p44
      %p47 = scmp.ne.s32.totalorder %s30, %s46
      %p48 = scmp.eq.s32.totalorder %s22, 0
      %p49 = por %p47, %p48
      %s50 = ssub.s32 %s16, %s23
      %p51 = scmp.eq.s32.totalorder %s50, 0
      %s53 = sadd.s32 %s52, 1
      %s54 = scalar_select %p51, %s52, %s53
      %p57 = pneg %p51
      %p58 = scmp.eq.s32.totalorder %s16, 1
      %p59 = por %p57, %p58
      %p60 = scmp.ne.s32.totalorder %s52, %s55
      %p61 = scmp.eq.s32.totalorder %s16, 0
      %p62 = por %p60, %p61
      %p63 = scmp.ne.s32.totalorder %s52, %s55
      %p64 = scmp.eq.s32.totalorder %s21, 1
      %p65 = por %p63, %p64
      %p66 = scmp.ne.s32.totalorder %s55, %s56
      %p67 = scmp.eq.s32.totalorder %s21, 0
      %p68 = por %p66, %p67
      %p69 = scmp.ne.s32.totalorder %s55, %s56
      %p70 = scmp.eq.s32.totalorder %s22, 1
      %p71 = por %p69, %p70
      %p73 = scmp.ne.s32.totalorder %s56, %s72
      %p74 = scmp.eq.s32.totalorder %s22, 0
      %p75 = por %p73, %p74
      %s76 = ssub.s32 %s16, %s23
      %p77 = scmp.eq.s32.totalorder %s76, 0
      %s79 = sadd.s32 %s78, 1
      %s80 = scalar_select %p77, %s78, %s79
      %p83 = pneg %p77
      %p84 = scmp.eq.s32.totalorder %s16, 1
      %p85 = por %p83, %p84
      %p86 = scmp.ne.s32.totalorder %s78, %s81
      %p87 = scmp.eq.s32.totalorder %s16, 0
      %p88 = por %p86, %p87
      %p89 = scmp.ne.s32.totalorder %s78, %s81
      %p90 = scmp.eq.s32.totalorder %s21, 1
      %p91 = por %p89, %p90
      %p92 = scmp.ne.s32.totalorder %s81, %s82
      %p93 = scmp.eq.s32.totalorder %s21, 0
      %p94 = por %p92, %p93
      %p95 = scmp.ne.s32.totalorder %s81, %s82
      %p96 = scmp.eq.s32.totalorder %s22, 1
      %p97 = por %p95, %p96
      %p99 = scmp.ne.s32.totalorder %s82, %s98
      %p100 = scmp.eq.s32.totalorder %s22, 0
      %p101 = por %p99, %p100
      %s102 = ssub.s32 %s16, %s23
      %p103 = scmp.eq.s32.totalorder %s102, 0
      %s105 = sadd.s32 %s104, 1
      %s106 = scalar_select %p103, %s104, %s105
      %p109 = pneg %p103
      %p110 = scmp.eq.s32.totalorder %s16, 1
      %p111 = por %p109, %p110
      %p112 = scmp.ne.s32.totalorder %s104, %s107
      %p113 = scmp.eq.s32.totalorder %s16, 0
      %p114 = por %p112, %p113
      %p115 = scmp.ne.s32.totalorder %s104, %s107
      %p116 = scmp.eq.s32.totalorder %s21, 1
      %p117 = por %p115, %p116
      %p118 = scmp.ne.s32.totalorder %s107, %s108
      %p119 = scmp.eq.s32.totalorder %s21, 0
      %p120 = por %p118, %p119
      %p121 = scmp.ne.s32.totalorder %s107, %s108
      %p122 = scmp.eq.s32.totalorder %s22, 1
      %p123 = por %p121, %p122
      %p125 = scmp.ne.s32.totalorder %s108, %s124
      %p126 = scmp.eq.s32.totalorder %s22, 0
      %p127 = por %p125, %p126
      %p128 = scmp.le.s32.totalorder 1, %s16
      %p129 = scmp.lt.s32.totalorder %s16, 3
      %p130 = pnand %p128, %p129
      %p131 = pneg %p130
      // Predicated region
      $region9: #{tpu_custom_call.1} parent=5 // pred_check
        _
      $region10: #{tpu_custom_call.1} parent=5 // pred_check_branch
        %133 = sbr.rel (%p130) target = $region12
      $region11: #{tpu_custom_call.1} parent=5 // pred_region
        %s134 = ssub.s32 %s16, 1
      $region12: #{tpu_custom_call.1} parent=5 // pred_fallthru
        _
      %p135 = scmp.lt.s32.totalorder %s16, 2
      // Predicated region
      $region13: #{tpu_custom_call.1} parent=5 // pred_check
        %p136 = pneg %p135
      $region14: #{tpu_custom_call.1} parent=5 // pred_check_branch
        %138 = sbr.rel (%p136) target = $region16
      $region15: #{tpu_custom_call.1} parent=5 // pred_region
        // Predicated region
        $region17: #{tpu_custom_call.1} parent=15 // pred_check
          %p139 = pneg %p36
        $region18: #{tpu_custom_call.1} parent=15 // pred_check_branch
          %141 = sbr.rel (%p139) target = $region20
        $region19: #{tpu_custom_call.1} parent=15 // pred_region
          %s142 = sand.u32 %s26, 1
          %s143 = scalar_lea.sflag [#allocation3], %s142
          %s144 = sand.u32 %s26, 1
          %s145 = smul.addr %s144, 64
          %s146 = scalar_lea.vmem [#allocation2], %s145
          %s147 = smul.u32 4, %s16
          %s149 = ssub.s32 1024, 1024
          %150 = vsyncadd %s143, %s149
          %s151 = smul.addr %s147, 2
          %s152 = smul.addr %s151, 128
          %s153 = scalar_lea.hbm %s0, %s152
          %s154 = sshll.u32 %s146, 4
          %s155 = int_to_ptr.vmem [resolvable:$true] %s154
          %160 = dma.hbm_to_vmem [thread:$0]  %s153, 1024, %s155, %s143, 256, 256, 16
        $region20: #{tpu_custom_call.1} parent=15 // pred_fallthru
          _
      $region16: #{tpu_custom_call.1} parent=5 // pred_fallthru
        _
      %p161 = scmp.le.s32.totalorder 1, %s16
      %p162 = scmp.lt.s32.totalorder %s16, 3
      %p163 = pnand %p161, %p162
      %p164 = pneg %p163
      // Predicated region
      $region21: #{tpu_custom_call.1} parent=5 // pred_check
        _
      $region22: #{tpu_custom_call.1} parent=5 // pred_check_branch
        %166 = sbr.rel (%p163) target = $region24
      $region23: #{tpu_custom_call.1} parent=5 // pred_region
        %s167 = ssub.s32 %s16, 1
        %s168 = sand.u32 %s29, 1
        %s169 = scalar_lea.sflag [#allocation3], %s168
        %s170 = sand.u32 %s29, 1
        %s171 = smul.addr %s170, 64
        %s172 = scalar_lea.vmem [#allocation2], %s171
        // Predicated region
        $region25: #{tpu_custom_call.1} parent=23 // pred_check
          %p173 = pneg %p42
        $region26: #{tpu_custom_call.1} parent=23 // pred_check_branch
          %175 = sbr.rel (%p173) target = $region28
        $region27: #{tpu_custom_call.1} parent=23 // pred_region
          %176 = dma.done %s169, 1024
        $region28: #{tpu_custom_call.1} parent=23 // pred_fallthru
          _
        %s177 = sand.u32 %s29, 1
        %s178 = scalar_lea.sflag [#allocation3], %s177
        %s179 = sand.u32 %s29, 1
        %s180 = smul.addr %s179, 64
        %s181 = scalar_lea.vmem [#allocation2], %s180
        %p182 = pneg %p42
        %p183 = pneg %p39
        %p184 = pneg %p68
        %p185 = pneg %p65
        %s186 = sand.u32 %s55, 1
        %s187 = scalar_lea.sflag [#allocation4], %s186
        %s188 = sand.u32 %s55, 1
        %s189 = smul.addr %s188, 64
        %s190 = scalar_lea.vmem [#allocation5], %s189
        %p191 = pneg %p94
        %p192 = pneg %p91
        %s193 = smul.u32 4, %s21
        %p194 = scmp.lt.s32.totalorder %s193, 7
        %s195 = scalar_select %p194, %s193, 7
        %s196 = smul.addr %s195, 8
        %s197 = scalar_lea.vmem %s2, %s196
        %p198 = pneg %p120
        %p199 = pneg %p117
        %s200 = smul.u32 4, %s21
        %p201 = scmp.lt.s32.totalorder %s200, 7
        %s202 = scalar_select %p201, %s200, 7
        %s203 = smul.addr %s202, 8
        %s204 = scalar_lea.vmem %s3, %s203
        %s205 = smul.u32 4, %s21
        %s206 = smul.u32 4, %s21
        %s207 = smul.u32 4, %s21
        %p208 = scmp.lt.s32.totalorder %s207, 7
        %s209 = scalar_select %p208, %s207, 7
        %s210 = smul.addr %s209, 8
        %s211 = scalar_lea.vmem %s2, %s210
        %s212 = smul.u32 4, %s21
        %s213 = smul.u32 4, %s21
        %p214 = scmp.lt.s32.totalorder %s213, 7
        %s215 = scalar_select %p214, %s213, 7
        %s216 = smul.addr %s215, 8
        %s217 = scalar_lea.vmem %s3, %s216
        %s218 = smul.u32 4, %s21
        %v219 = vld [vmem:[%s172] sm:$0xff]
        %v220 = vld [vmem:[%s172 + $0x8] sm:$0xff]
        %v221 = vld [vmem:[%s172 + $0x10] sm:$0xff]
        %v222 = vld [vmem:[%s172 + $0x18] sm:$0xff]
        %v223 = vld [vmem:[%s172 + $0x20] sm:$0xff]
        %v224 = vld [vmem:[%s172 + $0x28] sm:$0xff]
        %v225 = vld [vmem:[%s172 + $0x30] sm:$0xff]
        %v226 = vld [vmem:[%s172 + $0x38] sm:$0xff]
        %v227 = vmin.f32 %v219, %v220
        %228 = vmin.xlane.f32.xlu0 %v227
        %v229 = vpop.xlane.xlu0 %228
        %v230 = vmin.f32 %v221, %v222
        %231 = vmin.xlane.f32.xlu0 %v230
        %v232 = vpop.xlane.xlu0 %231
        %v233 = vmin.f32 %v223, %v224
        %234 = vmin.xlane.f32.xlu0 %v233
        %v235 = vpop.xlane.xlu0 %234
        %v236 = vmin.f32 %v225, %v226
        %237 = vmin.xlane.f32.xlu0 %v236
        %v238 = vpop.xlane.xlu0 %237
        %v239 = vmax.f32 %v219, %v220
        %240 = vmax.xlane.f32.xlu0 %v239
        %v241 = vpop.xlane.xlu0 %240
        %v242 = vmax.f32 %v221, %v222
        %243 = vmax.xlane.f32.xlu0 %v242
        %v244 = vpop.xlane.xlu0 %243
        %v245 = vmax.f32 %v223, %v224
        %246 = vmax.xlane.f32.xlu0 %v245
        %v247 = vpop.xlane.xlu0 %246
        %v248 = vmax.f32 %v225, %v226
        %249 = vmax.xlane.f32.xlu0 %v248
        %v250 = vpop.xlane.xlu0 %249
        %v251 = vsub.f32 %v241, %v229
        %v252 = vsub.f32 %v244, %v232
        %v253 = vsub.f32 %v247, %v235
        %v254 = vsub.f32 %v250, %v238
        %v255 = vmul.f32 %v251, 0.00390625
        %v256 = vmul.f32 %v252, 0.00390625
        %v257 = vmul.f32 %v253, 0.00390625
        %v258 = vmul.f32 %v254, 0.00390625
        %v259 = vrcp.pop %v255
        %v260 = vmul.f32 1.0, %v259
        %v261 = vrcp.pop %v256
        %v262 = vmul.f32 1.0, %v261
        %v263 = vrcp.pop %v257
        %v264 = vmul.f32 1.0, %v263
        %v265 = vrcp.pop %v258
        %v266 = vmul.f32 1.0, %v265
        %v267 = vmul.f32 %v219, %v260
        %v268 = vmul.f32 %v220, %v260
        %v269 = vmul.f32 %v221, %v262
        %v270 = vmul.f32 %v222, %v262
        %v271 = vmul.f32 %v223, %v264
        %v272 = vmul.f32 %v224, %v264
        %v273 = vmul.f32 %v225, %v266
        %v274 = vmul.f32 %v226, %v266
        %v275 = vadd.f32 %v267, %v229
        %v276 = vadd.f32 %v268, %v229
        %v277 = vadd.f32 %v269, %v232
        %v278 = vadd.f32 %v270, %v232
        %v279 = vadd.f32 %v271, %v235
        %v280 = vadd.f32 %v272, %v235
        %v281 = vadd.f32 %v273, %v238
        %v282 = vadd.f32 %v274, %v238
        %v283 = vround.ne.pseudo %v275
        %v284 = vround.ne.pseudo %v276
        %v285 = vround.ne.pseudo %v277
        %v286 = vround.ne.pseudo %v278
        %v287 = vround.ne.pseudo %v279
        %v288 = vround.ne.pseudo %v280
        %v289 = vround.ne.pseudo %v281
        %v290 = vround.ne.pseudo %v282
        %v291 = vmax.f32 %v283, 0.0
        %v292 = vmax.f32 %v284, 0.0
        %v293 = vmax.f32 %v285, 0.0
        %v294 = vmax.f32 %v286, 0.0
        %v295 = vmax.f32 %v287, 0.0
        %v296 = vmax.f32 %v288, 0.0
        %v297 = vmax.f32 %v289, 0.0
        %v298 = vmax.f32 %v290, 0.0
        %v299 = vmin.f32 %v291, 255.0
        %v300 = vmin.f32 %v292, 255.0
        %v301 = vmin.f32 %v293, 255.0
        %v302 = vmin.f32 %v294, 255.0
        %v303 = vmin.f32 %v295, 255.0
        %v304 = vmin.f32 %v296, 255.0
        %v305 = vmin.f32 %v297, 255.0
        %v306 = vmin.f32 %v298, 255.0
        %v307 = vsub.f32 %v299, %v229
        %v308 = vsub.f32 %v300, %v229
        %v309 = vsub.f32 %v301, %v232
        %v310 = vsub.f32 %v302, %v232
        %v311 = vsub.f32 %v303, %v235
        %v312 = vsub.f32 %v304, %v235
        %v313 = vsub.f32 %v305, %v238
        %v314 = vsub.f32 %v306, %v238
        %v315 = vmul.f32 %v307, %v255
        %v316 = vmul.f32 %v308, %v255
        %v317 = vmul.f32 %v309, %v256
        %v318 = vmul.f32 %v310, %v256
        %v319 = vmul.f32 %v311, %v257
        %v320 = vmul.f32 %v312, %v257
        %v321 = vmul.f32 %v313, %v258
        %v322 = vmul.f32 %v314, %v258
        %323 = vst [vmem:[%s190] sm:$0xff] %v315
        %324 = vst [vmem:[%s190 + $0x8] sm:$0xff] %v316
        %325 = vst [vmem:[%s190 + $0x10] sm:$0xff] %v317
        %326 = vst [vmem:[%s190 + $0x18] sm:$0xff] %v318
        %327 = vst [vmem:[%s190 + $0x20] sm:$0xff] %v319
        %328 = vst [vmem:[%s190 + $0x28] sm:$0xff] %v320
        %329 = vst [vmem:[%s190 + $0x30] sm:$0xff] %v321
        %330 = vst [vmem:[%s190 + $0x38] sm:$0xff] %v322
        %vm331 = vcmask 7168
        %332 = vst.msk [vmem:[%s211] sm:$0xff] %vm331, %v255
        %333 = vst.msk [vmem:[%s211 + $0x8] sm:$0xff] %vm331, %v256
        %334 = vst.msk [vmem:[%s211 + $0x10] sm:$0xff] %vm331, %v257
        %335 = vst.msk [vmem:[%s211 + $0x18] sm:$0xff] %vm331, %v258
        %336 = vst.msk [vmem:[%s217] sm:$0xff] %vm331, %v229
        %337 = vst.msk [vmem:[%s217 + $0x8] sm:$0xff] %vm331, %v232
        %338 = vst.msk [vmem:[%s217 + $0x10] sm:$0xff] %vm331, %v235
        %339 = vst.msk [vmem:[%s217 + $0x18] sm:$0xff] %vm331, %v238
        %s340 = sand.u32 %s55, 1
        %s341 = scalar_lea.sflag [#allocation4], %s340
        %s342 = sand.u32 %s55, 1
        %s343 = smul.addr %s342, 64
        %s344 = scalar_lea.vmem [#allocation5], %s343
        %s345 = smul.u32 4, %s21
        %p346 = scmp.lt.s32.totalorder %s345, 7
        %s347 = scalar_select %p346, %s345, 7
        %s348 = smul.addr %s347, 8
        %s349 = scalar_lea.vmem %s2, %s348
        %s350 = smul.u32 4, %s21
        %p351 = scmp.lt.s32.totalorder %s350, 7
        %s352 = scalar_select %p351, %s350, 7
        %s353 = smul.addr %s352, 8
        %s354 = scalar_lea.vmem %s3, %s353
        // Predicated region
        $region29: #{tpu_custom_call.1} parent=23 // pred_check
          %p355 = pneg %p65
        $region30: #{tpu_custom_call.1} parent=23 // pred_check_branch
          %357 = sbr.rel (%p355) target = $region32
        $region31: #{tpu_custom_call.1} parent=23 // pred_region
          %s358 = smul.u32 4, %s21
          %s360 = ssub.s32 1024, 1024
          %361 = vsyncadd %s341, %s360
          %s362 = smul.addr %s358, 2
          %s363 = smul.addr %s362, 128
          %s364 = scalar_lea.hbm %s1, %s363
          %s365 = sshll.u32 %s344, 4
          %s366 = int_to_ptr.vmem [resolvable:$true] %s365
          %371 = dma.vmem_to_hbm [thread:$0]  %s366, 1024, %s364, %s341, 256, 256, 16
        $region32: #{tpu_custom_call.1} parent=23 // pred_fallthru
          _
        // Predicated region
        $region33: #{tpu_custom_call.1} parent=23 // pred_check
          %p372 = pneg %p91
        $region34: #{tpu_custom_call.1} parent=23 // pred_check_branch
          %374 = sbr.rel (%p372) target = $region36
        $region35: #{tpu_custom_call.1} parent=23 // pred_region
          %s375 = smul.u32 4, %s21
        $region36: #{tpu_custom_call.1} parent=23 // pred_fallthru
          _
        // Predicated region
        $region37: #{tpu_custom_call.1} parent=23 // pred_check
          %p376 = pneg %p117
        $region38: #{tpu_custom_call.1} parent=23 // pred_check_branch
          %378 = sbr.rel (%p376) target = $region40
        $region39: #{tpu_custom_call.1} parent=23 // pred_region
          %s379 = smul.u32 4, %s21
        $region40: #{tpu_custom_call.1} parent=23 // pred_fallthru
          _
      $region24: #{tpu_custom_call.1} parent=5 // pred_fallthru
        _
      %p380 = scmp.le.s32.totalorder 2, %s16
      // Predicated region
      $region41: #{tpu_custom_call.1} parent=5 // pred_check
        %p381 = pneg %p380
      $region42: #{tpu_custom_call.1} parent=5 // pred_check_branch
        %383 = sbr.rel (%p381) target = $region44
      $region43: #{tpu_custom_call.1} parent=5 // pred_region
        %s384 = ssub.s32 %s16, 2
        // Predicated region
        $region45: #{tpu_custom_call.1} parent=43 // pred_check
          %p385 = pneg %p71
        $region46: #{tpu_custom_call.1} parent=43 // pred_check_branch
          %387 = sbr.rel (%p385) target = $region48
        $region47: #{tpu_custom_call.1} parent=43 // pred_region
          %s388 = sand.u32 %s56, 1
          %s389 = scalar_lea.sflag [#allocation4], %s388
          %s390 = sand.u32 %s56, 1
          %s391 = smul.addr %s390, 64
          %s392 = scalar_lea.vmem [#allocation5], %s391
          %393 = dma.done %s389, 1024
        $region48: #{tpu_custom_call.1} parent=43 // pred_fallthru
          _
        // Predicated region
        $region49: #{tpu_custom_call.1} parent=43 // pred_check
          %p394 = pneg %p97
        $region50: #{tpu_custom_call.1} parent=43 // pred_check_branch
          %396 = sbr.rel (%p394) target = $region52
        $region51: #{tpu_custom_call.1} parent=43 // pred_region
          %s397 = smul.u32 4, %s22
          %p398 = scmp.lt.s32.totalorder %s397, 7
          %s399 = scalar_select %p398, %s397, 7
          %s400 = smul.addr %s399, 8
          %s401 = scalar_lea.vmem %s2, %s400
        $region52: #{tpu_custom_call.1} parent=43 // pred_fallthru
          _
        // Predicated region
        $region53: #{tpu_custom_call.1} parent=43 // pred_check
          %p402 = pneg %p123
        $region54: #{tpu_custom_call.1} parent=43 // pred_check_branch
          %404 = sbr.rel (%p402) target = $region56
        $region55: #{tpu_custom_call.1} parent=43 // pred_region
          %s405 = smul.u32 4, %s22
          %p406 = scmp.lt.s32.totalorder %s405, 7
          %s407 = scalar_select %p406, %s405, 7
          %s408 = smul.addr %s407, 8
          %s409 = scalar_lea.vmem %s3, %s408
        $region56: #{tpu_custom_call.1} parent=43 // pred_fallthru
          _
      $region44: #{tpu_custom_call.1} parent=5 // pred_fallthru
        _
    $region6: #{tpu_custom_call.1} parent=1 // loop_footer
      %s20 = sadd.s32 1, %s16
    $region7: #{tpu_custom_call.1} parent=1 // loop_footer_branch
      %15 = sbr.rel target = $region3
    $region8: #{tpu_custom_call.1} parent=1 // loop_exit
      _
    %410 = vsyncpa [#allocation3], 1
    %s411 = scalar_lea.sflag [#allocation3], 1
    %412 = vsyncpa %s411, 1
    %413 = vsyncpa [#allocation4], 1
    %s414 = scalar_lea.sflag [#allocation4], 1
    %415 = vsyncpa %s414, 1

</llo_original>
